<compile_context>
chip_gen: v7x
topology: tpu7x:2x2x1
jax: 0.10.0
libtpu: 0.0.40
codegen_flags: <defaults>
</compile_context>

<pallas_src>
import functools

import jax
import jax.numpy as jnp
from jax.experimental import pallas as pl
from jax.experimental.pallas import tpu as pltpu

_EPS = 1e-5       # BatchNorm1d eps
_LEAKY = 0.01     # nn.LeakyReLU default slope


# ---------------------------------------------------------------------------
# Hardware-aware sizing helpers
# ---------------------------------------------------------------------------
def _tpu_budget_and_tile_cap():
    """Returns (vmem_limit_bytes to request, max row tile).

    Budget is ~3/4 of physical per-core VMEM: ~48 MiB on v7x (64 MiB/TC),
    ~96 MiB on v5e/v6e (128 MiB) -- leaves headroom for Mosaic internal
    scratch / pipeline bookkeeping.  Row-tile cap: M=128..256 already
    saturates the MXU M dimension; on v6e (single TensorCore, big VMEM) larger
    tiles further amortize the ~0.35 us per-grid-step overhead.
    """
    vmem = 64 * 1024 * 1024            # conservative fallback (v7x per-TC VMEM)
    cap = 256
    try:
        info = pltpu.get_tpu_info()
        vmem = int(info.vmem_capacity_bytes)
        if "6" in str(getattr(info, "chip_version", "")) and vmem >= (96 << 20):
            cap = 512
    except Exception:
        pass
    return (vmem // 4) * 3, cap


def _pick_row_tile(n, budget, cap):
    """Largest row tile (multiple of 8, divides n) whose live VMEM fits budget.

    Live bytes in the heaviest pass: 2 double-buffered (rt, n) f32 tiles
    (A in + A/A_hat out), a double-buffered (rt, 128) output tile, plus the
    resident Hx/Ho/d vectors.  Residents are counted double-buffered here even
    though they are requested single-buffered (pl.Buffered(1)) -- the
    difference is extra slack on JAX versions honoring pipeline_mode.
    """
    resident = 2 * 4 * n * (256 + 128 + 2)
    avail = budget - resident - (4 << 20)          # Mosaic-internal slack
    per_row = 16 * n + 1024
    best = None
    for rt in range(8, min(cap, n) + 1, 8):
        if n % rt == 0 and rt * per_row <= avail:
            best = rt
    return best


def _resident_spec(block_shape, index_map):
    """Constant-index resident input: single-buffer it (block never changes)."""
    try:
        return pl.BlockSpec(block_shape, index_map, pipeline_mode=pl.Buffered(1))
    except TypeError:   # older JAX without pipeline_mode on BlockSpec
        return pl.BlockSpec(block_shape, index_map)


# ---------------------------------------------------------------------------
# Fused fast path (small graphs): everything in one kernel / one launch.
# ---------------------------------------------------------------------------
def _fused_kernel(theta, h_ref, a_in_ref, gamma_ref, beta_ref, wcat_ref, bcat_ref,
                  out_ref, ahat_ref):
    n = a_in_ref.shape[0]
    h = h_ref[...]                                             # (n, C)
    mean = jnp.mean(h, axis=0, keepdims=True)                  # batch stats (training)
    var = jnp.mean((h - mean) ** 2, axis=0, keepdims=True)
    hbn = (h - mean) * jax.lax.rsqrt(var + _EPS) * gamma_ref[...] + beta_ref[...]

    # One MXU pass for both linears (shared tiny-K LHS); lane-aligned split.
    hxho = jnp.dot(hbn, wcat_ref[...], preferred_element_type=jnp.float32) + bcat_ref[...]
    hx = hxho[:, :theta]                                       # (n, 256)
    ho = hxho[:, theta:]                                       # (n, out_pad)

    # Scores: attention-style contraction on the last dims (MXU).  If MLIR ever
    # shows a per-call XLU relayout of the RHS here, emit Hx^T once instead.
    s = jax.lax.dot_general(hx, hx, (((1,), (1,)), ((), ())),
                            preferred_element_type=jnp.float32)            # (n, n)
    mask = jnp.ceil(a_in_ref[...] * 1e-5)                      # self.mask, in-kernel
    rows = jax.lax.broadcasted_iota(jnp.int32, (n, n), 0)
    cols = jax.lax.broadcasted_iota(jnp.int32, (n, n), 1)
    a = jnp.maximum(jax.nn.sigmoid(s), 0.1) * mask + jnp.where(rows == cols, 1.0, 0.0)

    # Symmetric normalization without any N x N transpose:
    #   A_hat = d^-1/2 (col) * A * d^-1/2 (row).
    d_inv = jax.lax.rsqrt(jnp.sum(a, axis=1, keepdims=True))   # (n, 1), always > 0 (+I)
    # Sublane->lane relayout of d_inv via a masked max-reduce (avoids relying on
    # Mosaic transposes of degenerate (n,1) shapes); valid because d_inv > 0.
    d_inv_row = jnp.max(jnp.where(rows == cols, d_inv, 0.0), axis=0, keepdims=True)
    a_hat = a * d_inv * d_inv_row
    ahat_ref[...] = a_hat

    o = jnp.dot(a_hat, ho, preferred_element_type=jnp.float32)             # (n, out_pad)
    out_ref[...] = jnp.where(o >= 0.0, o, _LEAKY * o)          # LeakyReLU(0.01)


# ---------------------------------------------------------------------------
# Tiled path, pass 1: BN (precomputed stats) + fused linear, row-tiled.
# ---------------------------------------------------------------------------
def _prep_kernel(theta, h_ref, mean_ref, var_ref, gamma_ref, beta_ref,
                 wcat_ref, bcat_ref, hx_ref, ho_ref):
    hbn = (h_ref[...] - mean_ref[...]) * jax.lax.rsqrt(var_ref[...] + _EPS)
    hbn = hbn * gamma_ref[...] + beta_ref[...]                 # (tr, C)
    hxho = jnp.dot(hbn, wcat_ref[...], preferred_element_type=jnp.float32) + bcat_ref[...]
    hx_ref[...] = hxho[:, :theta]
    ho_ref[...] = hxho[:, theta:]


# ---------------------------------------------------------------------------
# Tiled path, pass 2: adjacency row tile (computed ONCE, stashed to HBM) and
# per-row d^-1/2 (rsqrt folded in -> no host op between passes).
# ---------------------------------------------------------------------------
def _adj_deg_kernel(hx_ref, a_in_ref, a_ref, dinv_ref):
    tr, n = a_ref.shape
    row0 = pl.multiple_of(pl.program_id(0) * tr, tr)
    hx_t = hx_ref[pl.ds(row0, tr), :]                          # (tr, 256)
    s = jax.lax.dot_general(hx_t, hx_ref[...], (((1,), (1,)), ((), ())),
                            preferred_element_type=jnp.float32)            # (tr, n)
    mask = jnp.ceil(a_in_ref[...] * 1e-5)
    rows = jax.lax.broadcasted_iota(jnp.int32, (tr, n), 0) + row0
    cols = jax.lax.broadcasted_iota(jnp.int32, (tr, n), 1)
    a_t = jnp.maximum(jax.nn.sigmoid(s), 0.1) * mask + jnp.where(rows == cols, 1.0, 0.0)
    a_ref[...] = a_t                                           # unnormalized A tile
    dinv_ref[...] = jax.lax.rsqrt(jnp.sum(a_t, axis=1, keepdims=True))     # (tr, 1)


# ---------------------------------------------------------------------------
# Tiled path, pass 3: rescale the stored A tile on the VPU (transpose-free),
# write A_hat in place of A (input_output_aliases), and do the out matmul.
# ---------------------------------------------------------------------------
def _norm_out_kernel(ho_ref, drow_ref, a_ref, dcol_ref, out_ref, ahat_ref):
    a_hat = a_ref[...] * dcol_ref[...] * drow_ref[...]         # (tr,1)*(tr,n)*(1,n)
    ahat_ref[...] = a_hat
    o = jnp.dot(a_hat, ho_ref[...], preferred_element_type=jnp.float32)    # (tr, 128)
    out_ref[...] = jnp.where(o >= 0.0, o, _LEAKY * o)


# ---------------------------------------------------------------------------
# Wrapper
# ---------------------------------------------------------------------------
def gcn_layer(H, A_in, params, *, row_tile=None, force_tiled=False):
    """H: (N, C) f32, A_in: (N, N) f32. Returns (output (N, out_dim), A_hat (N, N))."""
    N, C = H.shape
    theta = params["w_theta_t"].shape[1]                       # 256
    out_dim = params["w_out_t"].shape[1]
    # 128 lanes is the practical floor for lane-dense stores; do not widen
    # further (pack several heads' W_out into these lanes instead if needed).
    out_pad = 128 * pl.cdiv(out_dim, 128)

    budget, tile_cap = _tpu_budget_and_tile_cap()

    # Fused weight / bias: [W_theta^T | W_out^T padded to out_pad lanes].
    w_out_p = jnp.zeros((C, out_pad), jnp.float32).at[:, :out_dim].set(params["w_out_t"])
    b_out_p = jnp.zeros((1, out_pad), jnp.float32).at[:, :out_dim].set(params["b_out"])
    w_cat = jnp.concatenate([params["w_theta_t"], w_out_p], axis=1)        # (C, theta+128)
    b_cat = jnp.concatenate([params["b_theta"], b_out_p], axis=1)          # (1, theta+128)

    vmem = pl.BlockSpec(memory_space=pltpu.MemorySpace.VMEM)

    # ---- fused single-call fast path (small graphs) --------------------------------
    # Approx live VMEM: A_in + A_hat + ~4 N^2 f32 intermediates + activations + slack.
    fused_bytes = 6 * N * N * 4 + N * (C + 2 * (theta + out_pad)) * 4 + (4 << 20)
    if not force_tiled and fused_bytes <= budget:
        out_p, a_hat = pl.pallas_call(
            functools.partial(_fused_kernel, theta),
            out_shape=(jax.ShapeDtypeStruct((N, out_pad), jnp.float32),
                       jax.ShapeDtypeStruct((N, N), jnp.float32)),
            in_specs=[vmem] * 6,
            out_specs=(vmem, vmem),
            compiler_params=pltpu.CompilerParams(vmem_limit_bytes=budget),
        )(H, A_in, params["gamma"], params["beta"], w_cat, b_cat)
        return out_p[:, :out_dim], a_hat

    # ---- tiled path (large graphs) --------------------------------------------------
    if row_tile is None:
        row_tile = _pick_row_tile(N, budget, tile_cap)
    if row_tile is None or N % row_tile != 0:
        # TODO(synk): remainder-tile handling (masked tail rows) for N with no
        # multiple-of-8 divisor that fits the VMEM budget.
        raise NotImplementedError(
            f"N={N}: no row tile divides N and fits the VMEM budget ({budget} B)")

    grid = (N // row_tile,)
    cparams = pltpu.CompilerParams(
        dimension_semantics=("parallel",),                     # megacore-shard row tiles
        vmem_limit_bytes=budget)

    # BN batch statistics: cheap O(N*C) pre-reduction by XLA so pass 1 can be
    # row-tiled, pipelined and 2-TC sharded for large N.
    mean = jnp.mean(H, axis=0, keepdims=True)
    var = jnp.mean((H - mean) ** 2, axis=0, keepdims=True)

    # pass 1: BN + fused (theta || out) linear, row-tiled.
    hx, ho = pl.pallas_call(
        functools.partial(_prep_kernel, theta),
        out_shape=(jax.ShapeDtypeStruct((N, theta), jnp.float32),
                   jax.ShapeDtypeStruct((N, out_pad), jnp.float32)),
        grid=grid,
        in_specs=[pl.BlockSpec((row_tile, C), lambda i: (i, 0)),
                  pl.BlockSpec((1, C), lambda i: (0, 0)),                   # mean
                  pl.BlockSpec((1, C), lambda i: (0, 0)),                   # var
                  pl.BlockSpec((1, C), lambda i: (0, 0)),                   # gamma
                  pl.BlockSpec((1, C), lambda i: (0, 0)),                   # beta
                  pl.BlockSpec((C, theta + out_pad), lambda i: (0, 0)),     # w_cat
                  pl.BlockSpec((1, theta + out_pad), lambda i: (0, 0))],    # b_cat
        out_specs=(pl.BlockSpec((row_tile, theta), lambda i: (i, 0)),
                   pl.BlockSpec((row_tile, out_pad), lambda i: (i, 0))),
        compiler_params=cparams,
    )(H, mean, var, params["gamma"], params["beta"], w_cat, b_cat)

    # pass 2: adjacency row tiles (computed once) + d^-1/2.
    a_buf, d_inv = pl.pallas_call(
        _adj_deg_kernel,
        out_shape=(jax.ShapeDtypeStruct((N, N), jnp.float32),
                   jax.ShapeDtypeStruct((N, 1), jnp.float32)),
        grid=grid,
        in_specs=[_resident_spec((N, theta), lambda i: (0, 0)),             # Hx resident
                  pl.BlockSpec((row_tile, N), lambda i: (i, 0))],           # A_in row tile
        out_specs=(pl.BlockSpec((row_tile, N), lambda i: (i, 0)),
                   pl.BlockSpec((row_tile, 1), lambda i: (i, 0))),
        compiler_params=cparams,
    )(hx, A_in)

    d_row = d_inv.reshape(1, N)        # free relayout; only host op between passes

    # pass 3: A_hat = d^-1/2 (col) * A * d^-1/2 (row) + output matmul.
    # A_hat overwrites the pass-2 A buffer (no extra N^2 HBM allocation).
    out_p, a_hat = pl.pallas_call(
        _norm_out_kernel,
        out_shape=(jax.ShapeDtypeStruct((N, out_pad), jnp.float32),
                   jax.ShapeDtypeStruct((N, N), jnp.float32)),
        grid=grid,
        in_specs=[_resident_spec((N, out_pad), lambda i: (0, 0)),           # Ho resident
                  _resident_spec((1, N), lambda i: (0, 0)),                 # d^-1/2 row
                  pl.BlockSpec((row_tile, N), lambda i: (i, 0)),            # A row tile
                  pl.BlockSpec((row_tile, 1), lambda i: (i, 0))],           # d^-1/2 col
        out_specs=(pl.BlockSpec((row_tile, out_pad), lambda i: (i, 0)),
                   pl.BlockSpec((row_tile, N), lambda i: (i, 0))),
        input_output_aliases={2: 1},                                        # A -> A_hat
        compiler_params=cparams,
    )(ho, d_row, a_buf, d_inv)

    return out_p[:, :out_dim], a_hat


# ---------------------------------------------------------------------------
# Pure-JAX reference (mirrors the PyTorch module in f32).
# ---------------------------------------------------------------------------
def _reference(H, A_in, params):
    mask = jnp.ceil(A_in * 1e-5)
    mean = jnp.mean(H, axis=0, keepdims=True)
    var = jnp.mean((H - mean) ** 2, axis=0, keepdims=True)
    Hbn = (H - mean) / jnp.sqrt(var + 1e-5) * params["gamma"] + params["beta"]
    Hx = Hbn @ params["w_theta_t"] + params["b_theta"]
    A = jnp.maximum(jax.nn.sigmoid(Hx @ Hx.T), 0.1) * mask + jnp.eye(H.shape[0])
    d_inv = jnp.power(A.sum(1), -0.5)
    A_hat = A * d_inv[:, None] * d_inv[None, :]
    out = A_hat @ (Hbn @ params["w_out_t"] + params["b_out"])
    out = jnp.where(out >= 0.0, out, 0.01 * out)
    return out, A_hat


if __name__ == "__main__":
    # Small shapes consistent with the module: N nodes, input_dim features.
    N, input_dim, output_dim, theta_dim = 64, 32, 16, 256

    key = jax.random.PRNGKey(0)
    k_h, k_a, k_wt, k_bt, k_wo, k_bo = jax.random.split(key, 6)

    H = jax.random.normal(k_h, (N, input_dim), dtype=jnp.float32)

    # Symmetric binary adjacency (self.A), used only through ceil(A * 1e-5).
    A_raw = (jax.random.uniform(k_a, (N, N)) > 0.5).astype(jnp.float32)
    A_in = jnp.maximum(A_raw, A_raw.T)

    # PyTorch-style init: uniform Linear weights (pre-transposed), BN gamma=1/beta=0.
    bound = 1.0 / jnp.sqrt(input_dim)
    params = {
        "gamma": jnp.ones((1, input_dim), jnp.float32),
        "beta": jnp.zeros((1, input_dim), jnp.float32),
        "w_theta_t": jax.random.uniform(k_wt, (input_dim, theta_dim), jnp.float32,
                                        -bound, bound),
        "b_theta": jax.random.uniform(k_bt, (1, theta_dim), jnp.float32,
                                      -bound, bound),
        "w_out_t": jax.random.uniform(k_wo, (input_dim, output_dim), jnp.float32,
                                      -bound, bound),
        "b_out": jax.random.uniform(k_bo, (1, output_dim), jnp.float32,
                                    -bound, bound),
    }

    # At N=64 this dispatches to the fused single-kernel fast path.
    fwd = jax.jit(gcn_layer)
    out, a_hat = jax.block_until_ready(fwd(H, A_in, params))

    ref_out, ref_ahat = _reference(H, A_in, params)
    assert out.shape == (N, output_dim) and a_hat.shape == (N, N)
    assert jnp.allclose(out, ref_out, rtol=1e-4, atol=1e-4)
    assert jnp.allclose(a_hat, ref_ahat, rtol=1e-4, atol=1e-4)

    print("KERNEL_OK")
</pallas_src>

<mosaic_0001>
module attributes {stable_mosaic.version = 11 : i64} {
  func.func @_fused_kernel(%arg0: memref<64x32xf32, #tpu.memory_space<vmem>>, %arg1: memref<64x64xf32, #tpu.memory_space<vmem>>, %arg2: memref<1x32xf32, #tpu.memory_space<vmem>>, %arg3: memref<1x32xf32, #tpu.memory_space<vmem>>, %arg4: memref<32x384xf32, #tpu.memory_space<vmem>>, %arg5: memref<1x384xf32, #tpu.memory_space<vmem>>, %arg6: memref<64x128xf32, #tpu.memory_space<vmem>>, %arg7: memref<64x64xf32, #tpu.memory_space<vmem>>) attributes {dimension_semantics = [], scalar_prefetch = 0 : i64, scratch_operands = 0 : i64, tpu.core_type = #tpu.core_type<tc>} {
    %c0 = arith.constant 0 : index
    %c0_0 = arith.constant 0 : index
    %0 = vector.load %arg0[%c0, %c0_0] : memref<64x32xf32, #tpu.memory_space<vmem>>, vector<64x32xf32>
    %cst = arith.constant dense<0.000000e+00> : vector<32xf32>
    %1 = vector.multi_reduction <add>, %0, %cst [0] : vector<64x32xf32> to vector<32xf32>
    %2 = vector.shape_cast %1 : vector<32xf32> to vector<1x32xf32>
    %cst_1 = arith.constant 6.400000e+01 : f32
    %3 = vector.broadcast %cst_1 : f32 to vector<1x32xf32>
    %4 = arith.divf %2, %3 : vector<1x32xf32>
    %5 = vector.broadcast %4 : vector<1x32xf32> to vector<64x32xf32>
    %6 = arith.subf %0, %5 : vector<64x32xf32>
    %7 = arith.mulf %6, %6 : vector<64x32xf32>
    %cst_2 = arith.constant dense<0.000000e+00> : vector<32xf32>
    %8 = vector.multi_reduction <add>, %7, %cst_2 [0] : vector<64x32xf32> to vector<32xf32>
    %9 = vector.shape_cast %8 : vector<32xf32> to vector<1x32xf32>
    %cst_3 = arith.constant 6.400000e+01 : f32
    %10 = vector.broadcast %cst_3 : f32 to vector<1x32xf32>
    %11 = arith.divf %9, %10 : vector<1x32xf32>
    %12 = vector.broadcast %4 : vector<1x32xf32> to vector<64x32xf32>
    %13 = arith.subf %0, %12 : vector<64x32xf32>
    %cst_4 = arith.constant 9.99999974E-6 : f32
    %14 = vector.broadcast %cst_4 : f32 to vector<1x32xf32>
    %15 = arith.addf %11, %14 : vector<1x32xf32>
    %16 = math.rsqrt %15 : vector<1x32xf32>
    %17 = vector.broadcast %16 : vector<1x32xf32> to vector<64x32xf32>
    %18 = arith.mulf %13, %17 : vector<64x32xf32>
    %c0_5 = arith.constant 0 : index
    %c0_6 = arith.constant 0 : index
    %19 = vector.load %arg2[%c0_5, %c0_6] : memref<1x32xf32, #tpu.memory_space<vmem>>, vector<1x32xf32>
    %20 = vector.broadcast %19 : vector<1x32xf32> to vector<64x32xf32>
    %21 = arith.mulf %18, %20 : vector<64x32xf32>
    %c0_7 = arith.constant 0 : index
    %c0_8 = arith.constant 0 : index
    %22 = vector.load %arg3[%c0_7, %c0_8] : memref<1x32xf32, #tpu.memory_space<vmem>>, vector<1x32xf32>
    %23 = vector.broadcast %22 : vector<1x32xf32> to vector<64x32xf32>
    %24 = arith.addf %21, %23 : vector<64x32xf32>
    %c0_9 = arith.constant 0 : index
    %c0_10 = arith.constant 0 : index
    %25 = vector.load %arg4[%c0_9, %c0_10] : memref<32x384xf32, #tpu.memory_space<vmem>>, vector<32x384xf32>
    %cst_11 = arith.constant dense<0.000000e+00> : vector<64x384xf32>
    %26 = tpu.matmul %24, %25, %cst_11 {dimension_numbers = #tpu.dot_dimension_numbers<[1], [0], [0], [1], [0, 0, 1, 1], [], []>} : vector<64x32xf32>, vector<32x384xf32>, vector<64x384xf32> -> vector<64x384xf32>
    %c0_12 = arith.constant 0 : index
    %c0_13 = arith.constant 0 : index
    %27 = vector.load %arg5[%c0_12, %c0_13] : memref<1x384xf32, #tpu.memory_space<vmem>>, vector<1x384xf32>
    %28 = vector.broadcast %27 : vector<1x384xf32> to vector<64x384xf32>
    %29 = arith.addf %26, %28 : vector<64x384xf32>
    %30 = vector.extract_strided_slice %29 {offsets = [0, 0], sizes = [64, 256], strides = [1, 1]} : vector<64x384xf32> to vector<64x256xf32>
    %31 = vector.extract_strided_slice %29 {offsets = [0, 256], sizes = [64, 128], strides = [1, 1]} : vector<64x384xf32> to vector<64x128xf32>
    %cst_14 = arith.constant dense<0.000000e+00> : vector<64x64xf32>
    %32 = tpu.matmul %30, %30, %cst_14 {dimension_numbers = #tpu.dot_dimension_numbers<[1], [1], [0], [0], [0, 0, 1, 0], [], []>} : vector<64x256xf32>, vector<64x256xf32>, vector<64x64xf32> -> vector<64x64xf32>
    %c0_15 = arith.constant 0 : index
    %c0_16 = arith.constant 0 : index
    %33 = vector.load %arg1[%c0_15, %c0_16] : memref<64x64xf32, #tpu.memory_space<vmem>>, vector<64x64xf32>
    %cst_17 = arith.constant 9.99999974E-6 : f32
    %34 = vector.broadcast %cst_17 : f32 to vector<64x64xf32>
    %35 = arith.mulf %33, %34 : vector<64x64xf32>
    %36 = math.ceil %35 : vector<64x64xf32>
    %37 = tpu.iota {dimensions = array<i32: 0>} : vector<64x64xi32>
    %38 = tpu.iota {dimensions = array<i32: 1>} : vector<64x64xi32>
    %39 = arith.negf %32 : vector<64x64xf32>
    %40 = math.exp %39 : vector<64x64xf32>
    %cst_18 = arith.constant 1.000000e+00 : f32
    %41 = vector.broadcast %cst_18 : f32 to vector<64x64xf32>
    %42 = arith.addf %41, %40 : vector<64x64xf32>
    %43 = arith.divf %41, %42 : vector<64x64xf32>
    %cst_19 = arith.constant 1.000000e-01 : f32
    %44 = vector.broadcast %cst_19 : f32 to vector<64x64xf32>
    %45 = arith.maximumf %43, %44 : vector<64x64xf32>
    %46 = arith.mulf %45, %36 : vector<64x64xf32>
    %47 = arith.cmpi eq, %37, %38 : vector<64x64xi32>
    %cst_20 = arith.constant 1.000000e+00 : f32
    %cst_21 = arith.constant 0.000000e+00 : f32
    %48 = vector.broadcast %cst_20 : f32 to vector<64x64xf32>
    %49 = vector.broadcast %cst_21 : f32 to vector<64x64xf32>
    %50 = arith.select %47, %48, %49 : vector<64x64xi1>, vector<64x64xf32>
    %51 = arith.addf %46, %50 : vector<64x64xf32>
    %cst_22 = arith.constant dense<0.000000e+00> : vector<64xf32>
    %52 = vector.multi_reduction <add>, %51, %cst_22 [1] : vector<64x64xf32> to vector<64xf32>
    %53 = vector.shape_cast %52 : vector<64xf32> to vector<64x1xf32>
    %54 = math.rsqrt %53 : vector<64x1xf32>
    %55 = arith.cmpi eq, %37, %38 : vector<64x64xi32>
    %cst_23 = arith.constant 0.000000e+00 : f32
    %56 = vector.shape_cast %54 : vector<64x1xf32> to vector<64x1xf32>
    %57 = vector.broadcast %56 : vector<64x1xf32> to vector<64x64xf32>
    %58 = vector.broadcast %cst_23 : f32 to vector<64x64xf32>
    %59 = arith.select %55, %57, %58 : vector<64x64xi1>, vector<64x64xf32>
    %cst_24 = arith.constant dense<0xFF800000> : vector<64xf32>
    %60 = vector.multi_reduction <maximumf>, %59, %cst_24 [0] : vector<64x64xf32> to vector<64xf32>
    %61 = vector.shape_cast %60 : vector<64xf32> to vector<1x64xf32>
    %62 = vector.broadcast %54 : vector<64x1xf32> to vector<64x64xf32>
    %63 = arith.mulf %51, %62 : vector<64x64xf32>
    %64 = vector.broadcast %61 : vector<1x64xf32> to vector<64x64xf32>
    %65 = arith.mulf %63, %64 : vector<64x64xf32>
    %c0_25 = arith.constant 0 : index
    %c0_26 = arith.constant 0 : index
    %66 = vector.load %arg7[%c0_25, %c0_26] : memref<64x64xf32, #tpu.memory_space<vmem>>, vector<64x64xf32>
    tpu.vector_store %arg7[%c0_25, %c0_26], %65 {strides = array<i32>} : memref<64x64xf32, #tpu.memory_space<vmem>>, vector<64x64xf32>,
    %cst_27 = arith.constant dense<0.000000e+00> : vector<64x128xf32>
    %67 = tpu.matmul %65, %31, %cst_27 {dimension_numbers = #tpu.dot_dimension_numbers<[1], [0], [0], [1], [0, 0, 1, 1], [], []>} : vector<64x64xf32>, vector<64x128xf32>, vector<64x128xf32> -> vector<64x128xf32>
    %cst_28 = arith.constant 0.000000e+00 : f32
    %68 = vector.broadcast %cst_28 : f32 to vector<64x128xf32>
    %69 = arith.cmpf oge, %67, %68 : vector<64x128xf32>
    %cst_29 = arith.constant 0.00999999977 : f32
    %70 = vector.broadcast %cst_29 : f32 to vector<64x128xf32>
    %71 = arith.mulf %70, %67 : vector<64x128xf32>
    %72 = arith.select %69, %67, %71 : vector<64x128xi1>, vector<64x128xf32>
    %c0_30 = arith.constant 0 : index
    %c0_31 = arith.constant 0 : index
    %73 = vector.load %arg6[%c0_30, %c0_31] : memref<64x128xf32, #tpu.memory_space<vmem>>, vector<64x128xf32>
    tpu.vector_store %arg6[%c0_30, %c0_31], %72 {strides = array<i32>} : memref<64x128xf32, #tpu.memory_space<vmem>>, vector<64x128xf32>,
    return
  }
}

</mosaic_0001>

<llo_original>
// kernel: gcn_layer.1
$region0: #{gcn_layer.1}
  #allocation0 [shape = 'u32[]', space=smem, size = 0x4, offset = 0x4, fixed_abs, tag = 'smem constant byte address 0x4 - core index']
  #allocation1 [shape = 'u32[144,128]{1,0:T(1,128)}', space=vmem, size = 0x12000, scoped, tag = 'internal scratch']
  %s0 = inlined_call_operand.vmem [shape: f32[64,32], index: 0, kind: input, shape index: {}]
  %s1 = inlined_call_operand.vmem [shape: f32[64,64], index: 1, kind: input, shape index: {}]
  %s2 = inlined_call_operand.vmem [shape: f32[1,32], index: 2, kind: input, shape index: {}]
  %s3 = inlined_call_operand.vmem [shape: f32[1,32], index: 3, kind: input, shape index: {}]
  %s4 = inlined_call_operand.vmem [shape: f32[32,384], index: 4, kind: input, shape index: {}]
  %s5 = inlined_call_operand.vmem [shape: f32[1,384], index: 5, kind: input, shape index: {}]
  %s6 = inlined_call_operand.vmem [shape: f32[64,128], index: 6, kind: output, shape index: {0}]
  %s7 = inlined_call_operand.hbm [shape: f32[64,64], index: 7, kind: output, shape index: {1}]
  %8 = xla_tuple %s6, %s7
  %s9 = sld [smem:[#allocation0]]
  $region42: #{gcn_layer.1} parent=0
    _
  %s11 = ssub.s32 1, %s9
  %s12 = scalar_select 0, %s11, %s9
  $region1: #{gcn_layer.1} parent=0
    #allocation2 [shape = 'u8[32768]{0}', space=vmem, size = 0x8000, scoped, tag = 'output window, operand 1, single buffered']
    #allocation3 [shape = 's32[1]{0}', space=sflag, size = 0x4, scoped, tag = 'scoped memory for gcn_layer.1']
    %13 = vsyncpa [#allocation3], 0
    // Predicated region
    $region2: #{gcn_layer.1} parent=1 // pred_check
      _
    $region3: #{gcn_layer.1} parent=1 // pred_check_branch
      %15 = sbr.rel (0) target = $region5
    $region4: #{gcn_layer.1} parent=1 // pred_region
      _
    $region5: #{gcn_layer.1} parent=1 // pred_fallthru
      _
    // Predicated region
    $region6: #{gcn_layer.1} parent=1 // pred_check
      _
    $region7: #{gcn_layer.1} parent=1 // pred_check_branch
      %17 = sbr.rel (0) target = $region9
    $region8: #{gcn_layer.1} parent=1 // pred_region
      _
    $region9: #{gcn_layer.1} parent=1 // pred_fallthru
      _
    // Predicated region
    $region10: #{gcn_layer.1} parent=1 // pred_check
      _
    $region11: #{gcn_layer.1} parent=1 // pred_check_branch
      %19 = sbr.rel (0) target = $region13
    $region12: #{gcn_layer.1} parent=1 // pred_region
      _
    $region13: #{gcn_layer.1} parent=1 // pred_fallthru
      _
    // Predicated region
    $region14: #{gcn_layer.1} parent=1 // pred_check
      _
    $region15: #{gcn_layer.1} parent=1 // pred_check_branch
      %21 = sbr.rel (0) target = $region17
    $region16: #{gcn_layer.1} parent=1 // pred_region
      _
    $region17: #{gcn_layer.1} parent=1 // pred_fallthru
      _
    // Predicated region
    $region18: #{gcn_layer.1} parent=1 // pred_check
      _
    $region19: #{gcn_layer.1} parent=1 // pred_check_branch
      %23 = sbr.rel (0) target = $region21
    $region20: #{gcn_layer.1} parent=1 // pred_region
      _
    $region21: #{gcn_layer.1} parent=1 // pred_fallthru
      _
    // Predicated region
    $region22: #{gcn_layer.1} parent=1 // pred_check
      _
    $region23: #{gcn_layer.1} parent=1 // pred_check_branch
      %25 = sbr.rel (0) target = $region25
    $region24: #{gcn_layer.1} parent=1 // pred_region
      _
    $region25: #{gcn_layer.1} parent=1 // pred_fallthru
      _
    %v26 = vld [vmem:[%s0] sm:$0xff]
    %v27 = vld [vmem:[%s0 + $0x8] sm:$0xff]
    %v28 = vld [vmem:[%s0 + $0x10] sm:$0xff]
    %v29 = vld [vmem:[%s0 + $0x18] sm:$0xff]
    %v30 = vld [vmem:[%s0 + $0x20] sm:$0xff]
    %v31 = vld [vmem:[%s0 + $0x28] sm:$0xff]
    %v32 = vld [vmem:[%s0 + $0x30] sm:$0xff]
    %v33 = vld [vmem:[%s0 + $0x38] sm:$0xff]
    %vm34 = vcmask 261120
    %v35 = vsel %vm34, %v26, 0.0
    %v36 = vsel %vm34, %v27, 0.0
    %v37 = vadd.f32 %v35, %v36
    %v38 = vsel %vm34, %v28, 0.0
    %v39 = vadd.f32 %v37, %v38
    %v40 = vsel %vm34, %v29, 0.0
    %v41 = vadd.f32 %v39, %v40
    %v42 = vsel %vm34, %v30, 0.0
    %v43 = vadd.f32 %v41, %v42
    %v44 = vsel %vm34, %v31, 0.0
    %v45 = vadd.f32 %v43, %v44
    %v46 = vsel %vm34, %v32, 0.0
    %v47 = vadd.f32 %v45, %v46
    %v48 = vsel %vm34, %v33, 0.0
    %v49 = vadd.f32 %v47, %v48
    %v50 = vrot.slane %v49, 4
    %v51 = vadd.f32 %v49, %v50
    %v52 = vrot.slane %v51, 2
    %v53 = vadd.f32 %v51, %v52
    %v54 = vrot.slane %v53, 1
    %v55 = vadd.f32 %v53, %v54
    %v56 = vrcp.pop 64.0
    %v57 = vmul.f32 %v55, %v56
    %v58 = vsub.f32 %v26, %v57
    %v59 = vsub.f32 %v27, %v57
    %v60 = vsub.f32 %v28, %v57
    %v61 = vsub.f32 %v29, %v57
    %v62 = vsub.f32 %v30, %v57
    %v63 = vsub.f32 %v31, %v57
    %v64 = vsub.f32 %v32, %v57
    %v65 = vsub.f32 %v33, %v57
    %v66 = vmul.f32 %v58, %v58
    %v67 = vmul.f32 %v59, %v59
    %v68 = vmul.f32 %v60, %v60
    %v69 = vmul.f32 %v61, %v61
    %v70 = vmul.f32 %v62, %v62
    %v71 = vmul.f32 %v63, %v63
    %v72 = vmul.f32 %v64, %v64
    %v73 = vmul.f32 %v65, %v65
    %v74 = vsel %vm34, %v66, 0.0
    %v75 = vsel %vm34, %v67, 0.0
    %v76 = vadd.f32 %v74, %v75
    %v77 = vsel %vm34, %v68, 0.0
    %v78 = vadd.f32 %v76, %v77
    %v79 = vsel %vm34, %v69, 0.0
    %v80 = vadd.f32 %v78, %v79
    %v81 = vsel %vm34, %v70, 0.0
    %v82 = vadd.f32 %v80, %v81
    %v83 = vsel %vm34, %v71, 0.0
    %v84 = vadd.f32 %v82, %v83
    %v85 = vsel %vm34, %v72, 0.0
    %v86 = vadd.f32 %v84, %v85
    %v87 = vsel %vm34, %v73, 0.0
    %v88 = vadd.f32 %v86, %v87
    %v89 = vrot.slane %v88, 4
    %v90 = vadd.f32 %v88, %v89
    %v91 = vrot.slane %v90, 2
    %v92 = vadd.f32 %v90, %v91
    %v93 = vrot.slane %v92, 1
    %v94 = vadd.f32 %v92, %v93
    %v95 = vmul.f32 %v94, %v56
    %v96 = vadd.f32 %v95, 1e-05
    %v97 = vrsqrt.pop %v96
    %v98 = vmul.f32 %v58, %v97
    %v99 = vmul.f32 %v59, %v97
    %v100 = vmul.f32 %v60, %v97
    %v101 = vmul.f32 %v61, %v97
    %v102 = vmul.f32 %v62, %v97
    %v103 = vmul.f32 %v63, %v97
    %v104 = vmul.f32 %v64, %v97
    %v105 = vmul.f32 %v65, %v97
    %v106 = vld [vmem:[%s2] sm:$0x1]
    %v108 = vlaneseq
    %v109 = vshrl.u32 %v108, 7
    %v110 = vsub.s32 0, %v109
    %v111 = vrot.slane %v106, %v110
    %v113 = vmul.f32 %v98, %v111
    %v114 = vmul.f32 %v99, %v111
    %v115 = vmul.f32 %v100, %v111
    %v116 = vmul.f32 %v101, %v111
    %v117 = vmul.f32 %v102, %v111
    %v118 = vmul.f32 %v103, %v111
    %v119 = vmul.f32 %v104, %v111
    %v120 = vmul.f32 %v105, %v111
    %v121 = vld [vmem:[%s3] sm:$0x1]
    %v123 = vlaneseq
    %v124 = vshrl.u32 %v123, 7
    %v125 = vsub.s32 0, %v124
    %v126 = vrot.slane %v121, %v125
    %v128 = vadd.f32 %v113, %v126
    %v129 = vadd.f32 %v114, %v126
    %v130 = vadd.f32 %v115, %v126
    %v131 = vadd.f32 %v116, %v126
    %v132 = vadd.f32 %v117, %v126
    %v133 = vadd.f32 %v118, %v126
    %v134 = vadd.f32 %v119, %v126
    %v135 = vadd.f32 %v120, %v126
    %v136 = vld [vmem:[%s4] sm:$0xff]
    %v137 = vld [vmem:[%s4 + $0x8] sm:$0xff]
    %v138 = vld [vmem:[%s4 + $0x10] sm:$0xff]
    %v139 = vld [vmem:[%s4 + $0x18] sm:$0xff]
    %v140 = vld [vmem:[%s4 + $0x20] sm:$0xff]
    %v141 = vld [vmem:[%s4 + $0x28] sm:$0xff]
    %v142 = vld [vmem:[%s4 + $0x30] sm:$0xff]
    %v143 = vld [vmem:[%s4 + $0x38] sm:$0xff]
    %v144 = vld [vmem:[%s4 + $0x40] sm:$0xff]
    %v145 = vld [vmem:[%s4 + $0x48] sm:$0xff]
    %v146 = vld [vmem:[%s4 + $0x50] sm:$0xff]
    %v147 = vld [vmem:[%s4 + $0x58] sm:$0xff]
    %v148 = vld [vmem:[%s5] sm:$0x7]
    %v150 = vlaneseq
    %v151 = vshrl.u32 %v150, 7
    %v152 = vsub.s32 0, %v151
    %v153 = vrot.slane %v148, %v152
    %v154 = vlaneseq
    %v155 = vshrl.u32 %v154, 7
    %v156 = vsub.s32 1, %v155
    %v157 = vrot.slane %v148, %v156
    %v158 = vlaneseq
    %v159 = vshrl.u32 %v158, 7
    %v160 = vsub.s32 2, %v159
    %v161 = vrot.slane %v148, %v160
    %v166 = vsel %vm34, %v128, 0
    %v169 = vsel %vm34, %v129, 0
    %v172 = vsel %vm34, %v130, 0
    %v175 = vsel %vm34, %v131, 0
    %v178 = vsel %vm34, %v132, 0
    %v181 = vsel %vm34, %v133, 0
    %v184 = vsel %vm34, %v134, 0
    %v187 = vsel %vm34, %v135, 0
    %189 = vmatprep.subr.mxu0 %v137
    %190 = vmatpush1.msra.mxu0 %v136
    %191 = vmatprep.subr.mxu0 %v140
    %192 = vmatpush1.msra.mxu0 %v139
    %193 = vmatprep.subr.mxu0 %v143
    %194 = vmatpush1.msra.mxu0 %v142
    %195 = vmatprep.subr.mxu0 %v146
    %196 = vmatpush1.msra.mxu0 %v145
    %197 = vmatprep.subr.mxu0 0.0
    %198 = vmatpush1.msra.mxu0 0.0
    %199 = vmatprep.subr.mxu0 0.0
    %200 = vmatpush1.msra.mxu0 0.0
    %201 = vmatprep.subr.mxu0 0.0
    %202 = vmatpush1.msra.mxu0 0.0
    %203 = vmatprep.subr.mxu0 0.0
    %204 = vmatpush1.msra.mxu0 0.0
    %205 = vmatprep.subr.mxu0 0.0
    %206 = vmatpush1.msra.mxu0 0.0
    %207 = vmatprep.subr.mxu0 0.0
    %208 = vmatpush1.msra.mxu0 0.0
    %209 = vmatprep.subr.mxu0 0.0
    %210 = vmatpush1.msra.mxu0 0.0
    %211 = vmatprep.subr.mxu0 0.0
    %212 = vmatpush1.msra.mxu0 0.0
    %213 = vmatprep.subr.mxu0 0.0
    %214 = vmatpush1.msra.mxu0 0.0
    %215 = vmatprep.subr.mxu0 0.0
    %216 = vmatpush1.msra.mxu0 0.0
    %217 = vmatprep.subr.mxu0 0.0
    %218 = vmatpush1.msra.mxu0 0.0
    %219 = vmatprep.subr.mxu0 0.0
    %220 = vmatpush1.msra.mxu0 0.0
    %221 = vmatprep.subr.mxu0 0.0
    %222 = vmatpush1.msra.mxu0 0.0
    %223 = vmatprep.subr.mxu0 0.0
    %224 = vmatpush1.msra.mxu0 0.0
    %225 = vmatprep.subr.mxu0 0.0
    %226 = vmatpush1.msra.mxu0 0.0
    %227 = vmatprep.subr.mxu0 0.0
    %228 = vmatpush1.msra.mxu0 0.0
    %229 = vmatprep.subr.mxu0 0.0
    %230 = vmatpush1.msra.mxu0 0.0
    %231 = vmatprep.subr.mxu0 0.0
    %232 = vmatpush1.msra.mxu0 0.0
    %233 = vmatprep.subr.mxu0 0.0
    %234 = vmatpush1.msra.mxu0 0.0
    %235 = vmatprep.subr.mxu0 0.0
    %236 = vmatpush1.msra.mxu0 0.0
    %237 = vmatprep.subr.mxu0 0.0
    %238 = vmatpush1.msra.mxu0 0.0
    %239 = vmatprep.subr.mxu0 0.0
    %240 = vmatpush1.msra.mxu0 0.0
    %241 = vmatprep.subr.mxu0 0.0
    %242 = vmatpush1.msra.mxu0 0.0
    %243 = vmatprep.subr.mxu0 0.0
    %244 = vmatpush1.msra.mxu0 0.0
    %245 = vmatprep.subr.mxu0 0.0
    %246 = vmatpush1.msra.mxu0 0.0
    %247 = vmatprep.subr.mxu0 0.0
    %248 = vmatpush1.msra.mxu0 0.0
    %249 = vmatprep.subr.mxu0 0.0
    %250 = vmatpush1.msra.mxu0 0.0
    %251 = vmatprep.subr.mxu0 0.0
    %252 = vmatpush1.msra.mxu0 0.0
    %253 = vmatprep.mubr.f32.mxu0 0.0
    %254 = vmatmul.mubr.f32.gmra.mrb[0].mxu0 %v166
    %v255 = vpop.f32.mrb[0].mxu0
    %v256 = vadd.f32 %v153, %v255
    %v257 = vpop.f32.mrb[0].mxu0
    %v258 = vadd.f32 %v157, %v257
    %259 = vmatprep.mubr.f32.mxu0 0.0
    %260 = vmatmul.mubr.f32.gmra.mrb[0].mxu0 %v169
    %v261 = vpop.f32.mrb[0].mxu0
    %v262 = vadd.f32 %v153, %v261
    %v263 = vpop.f32.mrb[0].mxu0
    %v264 = vadd.f32 %v157, %v263
    %265 = vmatprep.mubr.f32.mxu0 0.0
    %266 = vmatmul.mubr.f32.gmra.mrb[0].mxu0 %v172
    %v267 = vpop.f32.mrb[0].mxu0
    %v268 = vadd.f32 %v153, %v267
    %v269 = vpop.f32.mrb[0].mxu0
    %v270 = vadd.f32 %v157, %v269
    %271 = vmatprep.mubr.f32.mxu0 0.0
    %272 = vmatmul.mubr.f32.gmra.mrb[0].mxu0 %v175
    %v273 = vpop.f32.mrb[0].mxu0
    %v274 = vadd.f32 %v153, %v273
    %v275 = vpop.f32.mrb[0].mxu0
    %v276 = vadd.f32 %v157, %v275
    %277 = vmatprep.mubr.f32.mxu0 0.0
    %278 = vmatmul.mubr.f32.gmra.mrb[0].mxu0 %v178
    %v279 = vpop.f32.mrb[0].mxu0
    %v280 = vadd.f32 %v153, %v279
    %v281 = vpop.f32.mrb[0].mxu0
    %v282 = vadd.f32 %v157, %v281
    %283 = vmatprep.mubr.f32.mxu0 0.0
    %284 = vmatmul.mubr.f32.gmra.mrb[0].mxu0 %v181
    %v285 = vpop.f32.mrb[0].mxu0
    %v286 = vadd.f32 %v153, %v285
    %v287 = vpop.f32.mrb[0].mxu0
    %v288 = vadd.f32 %v157, %v287
    %289 = vmatprep.mubr.f32.mxu0 0.0
    %290 = vmatmul.mubr.f32.gmra.mrb[0].mxu0 %v184
    %v291 = vpop.f32.mrb[0].mxu0
    %v292 = vadd.f32 %v153, %v291
    %v293 = vpop.f32.mrb[0].mxu0
    %v294 = vadd.f32 %v157, %v293
    %295 = vmatprep.mubr.f32.mxu0 0.0
    %296 = vmatmul.mubr.f32.gmra.mrb[0].mxu0 %v187
    %v297 = vpop.f32.mrb[0].mxu0
    %v298 = vadd.f32 %v153, %v297
    %v299 = vpop.f32.mrb[0].mxu0
    %v300 = vadd.f32 %v157, %v299
    %301 = vdwg.mxu0
    %302 = vmatprep.subr.mxu0 0.0
    %303 = vmatpush1.msra.mxu0 %v138
    %304 = vmatprep.subr.mxu0 0.0
    %305 = vmatpush1.msra.mxu0 %v141
    %306 = vmatprep.subr.mxu0 0.0
    %307 = vmatpush1.msra.mxu0 %v144
    %308 = vmatprep.subr.mxu0 0.0
    %309 = vmatpush1.msra.mxu0 %v147
    %310 = vmatprep.subr.mxu0 0.0
    %311 = vmatpush1.msra.mxu0 0.0
    %312 = vmatprep.subr.mxu0 0.0
    %313 = vmatpush1.msra.mxu0 0.0
    %314 = vmatprep.subr.mxu0 0.0
    %315 = vmatpush1.msra.mxu0 0.0
    %316 = vmatprep.subr.mxu0 0.0
    %317 = vmatpush1.msra.mxu0 0.0
    %318 = vmatprep.subr.mxu0 0.0
    %319 = vmatpush1.msra.mxu0 0.0
    %320 = vmatprep.subr.mxu0 0.0
    %321 = vmatpush1.msra.mxu0 0.0
    %322 = vmatprep.subr.mxu0 0.0
    %323 = vmatpush1.msra.mxu0 0.0
    %324 = vmatprep.subr.mxu0 0.0
    %325 = vmatpush1.msra.mxu0 0.0
    %326 = vmatprep.subr.mxu0 0.0
    %327 = vmatpush1.msra.mxu0 0.0
    %328 = vmatprep.subr.mxu0 0.0
    %329 = vmatpush1.msra.mxu0 0.0
    %330 = vmatprep.subr.mxu0 0.0
    %331 = vmatpush1.msra.mxu0 0.0
    %332 = vmatprep.subr.mxu0 0.0
    %333 = vmatpush1.msra.mxu0 0.0
    %334 = vmatprep.subr.mxu0 0.0
    %335 = vmatpush1.msra.mxu0 0.0
    %336 = vmatprep.subr.mxu0 0.0
    %337 = vmatpush1.msra.mxu0 0.0
    %338 = vmatprep.subr.mxu0 0.0
    %339 = vmatpush1.msra.mxu0 0.0
    %340 = vmatprep.subr.mxu0 0.0
    %341 = vmatpush1.msra.mxu0 0.0
    %342 = vmatprep.subr.mxu0 0.0
    %343 = vmatpush1.msra.mxu0 0.0
    %344 = vmatprep.subr.mxu0 0.0
    %345 = vmatpush1.msra.mxu0 0.0
    %346 = vmatprep.subr.mxu0 0.0
    %347 = vmatpush1.msra.mxu0 0.0
    %348 = vmatprep.subr.mxu0 0.0
    %349 = vmatpush1.msra.mxu0 0.0
    %350 = vmatprep.subr.mxu0 0.0
    %351 = vmatpush1.msra.mxu0 0.0
    %352 = vmatprep.subr.mxu0 0.0
    %353 = vmatpush1.msra.mxu0 0.0
    %354 = vmatprep.subr.mxu0 0.0
    %355 = vmatpush1.msra.mxu0 0.0
    %356 = vmatprep.subr.mxu0 0.0
    %357 = vmatpush1.msra.mxu0 0.0
    %358 = vmatprep.subr.mxu0 0.0
    %359 = vmatpush1.msra.mxu0 0.0
    %360 = vmatprep.subr.mxu0 0.0
    %361 = vmatpush1.msra.mxu0 0.0
    %362 = vmatprep.subr.mxu0 0.0
    %363 = vmatpush1.msra.mxu0 0.0
    %364 = vmatprep.subr.mxu0 0.0
    %365 = vmatpush1.msra.mxu0 0.0
    %366 = vmatprep.mubr.f32.mxu0 0.0
    %367 = vmatmul.mubr.f32.gmra.mrb[0].mxu0 %v166
    %v368 = vpop.f32.mrb[0].mxu0
    %v369 = vadd.f32 %v161, %v368
    %v370 = vpop.f32.mrb[0].mxu0
    %371 = vmatprep.mubr.f32.mxu0 0.0
    %372 = vmatmul.mubr.f32.gmra.mrb[0].mxu0 %v169
    %v373 = vpop.f32.mrb[0].mxu0
    %v374 = vadd.f32 %v161, %v373
    %v375 = vpop.f32.mrb[0].mxu0
    %376 = vmatprep.mubr.f32.mxu0 0.0
    %377 = vmatmul.mubr.f32.gmra.mrb[0].mxu0 %v172
    %v378 = vpop.f32.mrb[0].mxu0
    %v379 = vadd.f32 %v161, %v378
    %v380 = vpop.f32.mrb[0].mxu0
    %381 = vmatprep.mubr.f32.mxu0 0.0
    %382 = vmatmul.mubr.f32.gmra.mrb[0].mxu0 %v175
    %v383 = vpop.f32.mrb[0].mxu0
    %v384 = vadd.f32 %v161, %v383
    %v385 = vpop.f32.mrb[0].mxu0
    %386 = vmatprep.mubr.f32.mxu0 0.0
    %387 = vmatmul.mubr.f32.gmra.mrb[0].mxu0 %v178
    %v388 = vpop.f32.mrb[0].mxu0
    %v389 = vadd.f32 %v161, %v388
    %v390 = vpop.f32.mrb[0].mxu0
    %391 = vmatprep.mubr.f32.mxu0 0.0
    %392 = vmatmul.mubr.f32.gmra.mrb[0].mxu0 %v181
    %v393 = vpop.f32.mrb[0].mxu0
    %v394 = vadd.f32 %v161, %v393
    %v395 = vpop.f32.mrb[0].mxu0
    %396 = vmatprep.mubr.f32.mxu0 0.0
    %397 = vmatmul.mubr.f32.gmra.mrb[0].mxu0 %v184
    %v398 = vpop.f32.mrb[0].mxu0
    %v399 = vadd.f32 %v161, %v398
    %v400 = vpop.f32.mrb[0].mxu0
    %401 = vmatprep.mubr.f32.mxu0 0.0
    %402 = vmatmul.mubr.f32.gmra.mrb[0].mxu0 %v187
    %v403 = vpop.f32.mrb[0].mxu0
    %v404 = vadd.f32 %v161, %v403
    %v405 = vpop.f32.mrb[0].mxu0
    %406 = vdwg.mxu0
    %407 = vmatprep.subr.mxu0 %v258
    %408 = vmatpush1.xpose.msra.mxu0 %v256
    %409 = vmatprep.subr.mxu0 %v264
    %410 = vmatpush1.xpose.msra.mxu0 %v262
    %411 = vmatprep.subr.mxu0 %v270
    %412 = vmatpush1.xpose.msra.mxu0 %v268
    %413 = vmatprep.subr.mxu0 %v276
    %414 = vmatpush1.xpose.msra.mxu0 %v274
    %415 = vmatprep.subr.mxu0 %v282
    %416 = vmatpush1.xpose.msra.mxu0 %v280
    %417 = vmatprep.subr.mxu0 %v288
    %418 = vmatpush1.xpose.msra.mxu0 %v286
    %419 = vmatprep.subr.mxu0 %v294
    %420 = vmatpush1.xpose.msra.mxu0 %v292
    %421 = vmatprep.subr.mxu0 %v300
    %422 = vmatpush1.xpose.msra.mxu0 %v298
    %423 = vmatprep.subr.mxu0 0.0
    %424 = vmatpush1.xpose.msra.mxu0 0.0
    %425 = vmatprep.subr.mxu0 0.0
    %426 = vmatpush1.xpose.msra.mxu0 0.0
    %427 = vmatprep.subr.mxu0 0.0
    %428 = vmatpush1.xpose.msra.mxu0 0.0
    %429 = vmatprep.subr.mxu0 0.0
    %430 = vmatpush1.xpose.msra.mxu0 0.0
    %431 = vmatprep.subr.mxu0 0.0
    %432 = vmatpush1.xpose.msra.mxu0 0.0
    %433 = vmatprep.subr.mxu0 0.0
    %434 = vmatpush1.xpose.msra.mxu0 0.0
    %435 = vmatprep.subr.mxu0 0.0
    %436 = vmatpush1.xpose.msra.mxu0 0.0
    %437 = vmatprep.subr.mxu0 0.0
    %438 = vmatpush1.xpose.msra.mxu0 0.0
    %439 = vmatprep.subr.mxu0 0.0
    %440 = vmatpush1.xpose.msra.mxu0 0.0
    %441 = vmatprep.subr.mxu0 0.0
    %442 = vmatpush1.xpose.msra.mxu0 0.0
    %443 = vmatprep.subr.mxu0 0.0
    %444 = vmatpush1.xpose.msra.mxu0 0.0
    %445 = vmatprep.subr.mxu0 0.0
    %446 = vmatpush1.xpose.msra.mxu0 0.0
    %447 = vmatprep.subr.mxu0 0.0
    %448 = vmatpush1.xpose.msra.mxu0 0.0
    %449 = vmatprep.subr.mxu0 0.0
    %450 = vmatpush1.xpose.msra.mxu0 0.0
    %451 = vmatprep.subr.mxu0 0.0
    %452 = vmatpush1.xpose.msra.mxu0 0.0
    %453 = vmatprep.subr.mxu0 0.0
    %454 = vmatpush1.xpose.msra.mxu0 0.0
    %455 = vmatprep.subr.mxu0 0.0
    %456 = vmatpush1.xpose.msra.mxu0 0.0
    %457 = vmatprep.subr.mxu0 0.0
    %458 = vmatpush1.xpose.msra.mxu0 0.0
    %459 = vmatprep.subr.mxu0 0.0
    %460 = vmatpush1.xpose.msra.mxu0 0.0
    %461 = vmatprep.subr.mxu0 0.0
    %462 = vmatpush1.xpose.msra.mxu0 0.0
    %463 = vmatprep.subr.mxu0 0.0
    %464 = vmatpush1.xpose.msra.mxu0 0.0
    %465 = vmatprep.subr.mxu0 0.0
    %466 = vmatpush1.xpose.msra.mxu0 0.0
    %467 = vmatprep.subr.mxu0 0.0
    %468 = vmatpush1.xpose.msra.mxu0 0.0
    %469 = vmatprep.subr.mxu0 0.0
    %470 = vmatpush1.xpose.msra.mxu0 0.0
    %471 = vmatprep.mubr.f32.mxu0 %v258
    %472 = vmatmul.mubr.f32.gmra.mrb[0].mxu0 %v256
    %v473 = vpop.f32.mrb[0].mxu0
    %v474 = vadd.f32 0.0, %v473
    %v475 = vpop.f32.mrb[0].mxu0
    %476 = vmatprep.mubr.f32.mxu0 %v264
    %477 = vmatmul.mubr.f32.gmra.mrb[0].mxu0 %v262
    %v478 = vpop.f32.mrb[0].mxu0
    %v479 = vadd.f32 0.0, %v478
    %v480 = vpop.f32.mrb[0].mxu0
    %481 = vmatprep.mubr.f32.mxu0 %v270
    %482 = vmatmul.mubr.f32.gmra.mrb[0].mxu0 %v268
    %v483 = vpop.f32.mrb[0].mxu0
    %v484 = vadd.f32 0.0, %v483
    %v485 = vpop.f32.mrb[0].mxu0
    %486 = vmatprep.mubr.f32.mxu0 %v276
    %487 = vmatmul.mubr.f32.gmra.mrb[0].mxu0 %v274
    %v488 = vpop.f32.mrb[0].mxu0
    %v489 = vadd.f32 0.0, %v488
    %v490 = vpop.f32.mrb[0].mxu0
    %491 = vmatprep.mubr.f32.mxu0 %v282
    %492 = vmatmul.mubr.f32.gmra.mrb[0].mxu0 %v280
    %v493 = vpop.f32.mrb[0].mxu0
    %v494 = vadd.f32 0.0, %v493
    %v495 = vpop.f32.mrb[0].mxu0
    %496 = vmatprep.mubr.f32.mxu0 %v288
    %497 = vmatmul.mubr.f32.gmra.mrb[0].mxu0 %v286
    %v498 = vpop.f32.mrb[0].mxu0
    %v499 = vadd.f32 0.0, %v498
    %v500 = vpop.f32.mrb[0].mxu0
    %501 = vmatprep.mubr.f32.mxu0 %v294
    %502 = vmatmul.mubr.f32.gmra.mrb[0].mxu0 %v292
    %v503 = vpop.f32.mrb[0].mxu0
    %v504 = vadd.f32 0.0, %v503
    %v505 = vpop.f32.mrb[0].mxu0
    %506 = vmatprep.mubr.f32.mxu0 %v300
    %507 = vmatmul.mubr.f32.gmra.mrb[0].mxu0 %v298
    %v508 = vpop.f32.mrb[0].mxu0
    %v509 = vadd.f32 0.0, %v508
    %v510 = vpop.f32.mrb[0].mxu0
    %511 = vdwg.mxu0
    %v512 = vld [vmem:[%s1] sm:$0xff]
    %v513 = vld [vmem:[%s1 + $0x8] sm:$0xff]
    %v514 = vld [vmem:[%s1 + $0x10] sm:$0xff]
    %v515 = vld [vmem:[%s1 + $0x18] sm:$0xff]
    %v516 = vld [vmem:[%s1 + $0x20] sm:$0xff]
    %v517 = vld [vmem:[%s1 + $0x28] sm:$0xff]
    %v518 = vld [vmem:[%s1 + $0x30] sm:$0xff]
    %v519 = vld [vmem:[%s1 + $0x38] sm:$0xff]
    %v520 = vmul.f32 %v512, 1e-05
    %v521 = vmul.f32 %v513, 1e-05
    %v522 = vmul.f32 %v514, 1e-05
    %v523 = vmul.f32 %v515, 1e-05
    %v524 = vmul.f32 %v516, 1e-05
    %v525 = vmul.f32 %v517, 1e-05
    %v526 = vmul.f32 %v518, 1e-05
    %v527 = vmul.f32 %v519, 1e-05
    %v528 = vceil.f32 %v520
    %v529 = vceil.f32 %v521
    %v530 = vceil.f32 %v522
    %v531 = vceil.f32 %v523
    %v532 = vceil.f32 %v524
    %v533 = vceil.f32 %v525
    %v534 = vceil.f32 %v526
    %v535 = vceil.f32 %v527
    %v536 = vlaneseq
    %v537 = vshrl.u32 %v536, 7
    %v538 = vadd.s32 %v537, 8
    %v539 = vadd.s32 %v537, 16
    %v540 = vadd.s32 %v537, 24
    %v541 = vadd.s32 %v537, 32
    %v542 = vadd.s32 %v537, 40
    %v543 = vadd.s32 %v537, 48
    %v544 = vadd.s32 %v537, 56
    %v545 = vlaneseq
    %v546 = vand.u32 %v545, 127
    %v547 = vxor.u32 %v474, 2147483648
    %v548 = vxor.u32 %v479, 2147483648
    %v549 = vxor.u32 %v484, 2147483648
    %v550 = vxor.u32 %v489, 2147483648
    %v551 = vxor.u32 %v494, 2147483648
    %v552 = vxor.u32 %v499, 2147483648
    %v553 = vxor.u32 %v504, 2147483648
    %v554 = vxor.u32 %v509, 2147483648
    %v555 = vmul.f32 %v547, 1.442695
    %v556 = vpow.pop %v555
    %v557 = vmul.f32 %v548, 1.442695
    %v558 = vpow.pop %v557
    %v559 = vmul.f32 %v549, 1.442695
    %v560 = vpow.pop %v559
    %v561 = vmul.f32 %v550, 1.442695
    %v562 = vpow.pop %v561
    %v563 = vmul.f32 %v551, 1.442695
    %v564 = vpow.pop %v563
    %v565 = vmul.f32 %v552, 1.442695
    %v566 = vpow.pop %v565
    %v567 = vmul.f32 %v553, 1.442695
    %v568 = vpow.pop %v567
    %v569 = vmul.f32 %v554, 1.442695
    %v570 = vpow.pop %v569
    %v571 = vadd.f32 %v556, 1.0
    %v572 = vadd.f32 %v558, 1.0
    %v573 = vadd.f32 %v560, 1.0
    %v574 = vadd.f32 %v562, 1.0
    %v575 = vadd.f32 %v564, 1.0
    %v576 = vadd.f32 %v566, 1.0
    %v577 = vadd.f32 %v568, 1.0
    %v578 = vadd.f32 %v570, 1.0
    %v579 = vrcp.pop %v571
    %v580 = vmul.f32 1.0, %v579
    %v581 = vrcp.pop %v572
    %v582 = vmul.f32 1.0, %v581
    %v583 = vrcp.pop %v573
    %v584 = vmul.f32 1.0, %v583
    %v585 = vrcp.pop %v574
    %v586 = vmul.f32 1.0, %v585
    %v587 = vrcp.pop %v575
    %v588 = vmul.f32 1.0, %v587
    %v589 = vrcp.pop %v576
    %v590 = vmul.f32 1.0, %v589
    %v591 = vrcp.pop %v577
    %v592 = vmul.f32 1.0, %v591
    %v593 = vrcp.pop %v578
    %v594 = vmul.f32 1.0, %v593
    %v595 = vmax.f32 %v580, 0.1
    %v596 = vmax.f32 %v582, 0.1
    %v597 = vmax.f32 %v584, 0.1
    %v598 = vmax.f32 %v586, 0.1
    %v599 = vmax.f32 %v588, 0.1
    %v600 = vmax.f32 %v590, 0.1
    %v601 = vmax.f32 %v592, 0.1
    %v602 = vmax.f32 %v594, 0.1
    %v603 = vmul.f32 %v595, %v528
    %v604 = vmul.f32 %v596, %v529
    %v605 = vmul.f32 %v597, %v530
    %v606 = vmul.f32 %v598, %v531
    %v607 = vmul.f32 %v599, %v532
    %v608 = vmul.f32 %v600, %v533
    %v609 = vmul.f32 %v601, %v534
    %v610 = vmul.f32 %v602, %v535
    %vm611 = vcmp.eq.s32.totalorder %v537, %v546
    %vm612 = vcmp.eq.s32.totalorder %v538, %v546
    %vm613 = vcmp.eq.s32.totalorder %v539, %v546
    %vm614 = vcmp.eq.s32.totalorder %v540, %v546
    %vm615 = vcmp.eq.s32.totalorder %v541, %v546
    %vm616 = vcmp.eq.s32.totalorder %v542, %v546
    %vm617 = vcmp.eq.s32.totalorder %v543, %v546
    %vm618 = vcmp.eq.s32.totalorder %v544, %v546
    %v619 = vsel %vm611, 1.0, 0.0
    %v620 = vsel %vm612, 1.0, 0.0
    %v621 = vsel %vm613, 1.0, 0.0
    %v622 = vsel %vm614, 1.0, 0.0
    %v623 = vsel %vm615, 1.0, 0.0
    %v624 = vsel %vm616, 1.0, 0.0
    %v625 = vsel %vm617, 1.0, 0.0
    %v626 = vsel %vm618, 1.0, 0.0
    %v627 = vadd.f32 %v603, %v619
    %v628 = vadd.f32 %v604, %v620
    %v629 = vadd.f32 %v605, %v621
    %v630 = vadd.f32 %v606, %v622
    %v631 = vadd.f32 %v607, %v623
    %v632 = vadd.f32 %v608, %v624
    %v633 = vadd.f32 %v609, %v625
    %v634 = vadd.f32 %v610, %v626
    %vm635 = vcmask 523264
    %v636 = vsel %vm635, %v627, 0.0
    %637 = vadd.xlane.f32.xlu0 %v636
    %v638 = vpop.xlane.xlu0 %637
    %v639 = vsel %vm635, %v628, 0.0
    %640 = vadd.xlane.f32.xlu0 %v639
    %v641 = vpop.xlane.xlu0 %640
    %v642 = vsel %vm635, %v629, 0.0
    %643 = vadd.xlane.f32.xlu0 %v642
    %v644 = vpop.xlane.xlu0 %643
    %v645 = vsel %vm635, %v630, 0.0
    %646 = vadd.xlane.f32.xlu0 %v645
    %v647 = vpop.xlane.xlu0 %646
    %v648 = vsel %vm635, %v631, 0.0
    %649 = vadd.xlane.f32.xlu0 %v648
    %v650 = vpop.xlane.xlu0 %649
    %v651 = vsel %vm635, %v632, 0.0
    %652 = vadd.xlane.f32.xlu0 %v651
    %v653 = vpop.xlane.xlu0 %652
    %v654 = vsel %vm635, %v633, 0.0
    %655 = vadd.xlane.f32.xlu0 %v654
    %v656 = vpop.xlane.xlu0 %655
    %v657 = vsel %vm635, %v634, 0.0
    %658 = vadd.xlane.f32.xlu0 %v657
    %v659 = vpop.xlane.xlu0 %658
    %v660 = vrsqrt.pop %v638
    %v661 = vrsqrt.pop %v641
    %v662 = vrsqrt.pop %v644
    %v663 = vrsqrt.pop %v647
    %v664 = vrsqrt.pop %v650
    %v665 = vrsqrt.pop %v653
    %v666 = vrsqrt.pop %v656
    %v667 = vrsqrt.pop %v659
    %v668 = vsel %vm611, %v660, 0.0
    %v669 = vsel %vm612, %v661, 0.0
    %v670 = vsel %vm613, %v662, 0.0
    %v671 = vsel %vm614, %v663, 0.0
    %v672 = vsel %vm615, %v664, 0.0
    %v673 = vsel %vm616, %v665, 0.0
    %v674 = vsel %vm617, %v666, 0.0
    %v675 = vsel %vm618, %v667, 0.0
    %v676 = vsel %vm635, %v668, -inf
    %v677 = vsel %vm635, %v669, -inf
    %v678 = vsel %vm635, %v670, -inf
    %v679 = vsel %vm635, %v671, -inf
    %v680 = vsel %vm635, %v672, -inf
    %v681 = vmax.f32 %v676, %v680
    %v682 = vsel %vm635, %v673, -inf
    %v683 = vmax.f32 %v677, %v682
    %v684 = vsel %vm635, %v674, -inf
    %v685 = vmax.f32 %v678, %v684
    %v686 = vsel %vm635, %v675, -inf
    %v687 = vmax.f32 %v679, %v686
    %v688 = vmax.f32 %v681, %v683
    %v689 = vmax.f32 %v685, %v687
    %v690 = vmax.f32 %v688, %v689
    %v691 = vrot.slane %v690, 4
    %v692 = vmax.f32 %v690, %v691
    %v693 = vrot.slane %v692, 2
    %v694 = vmax.f32 %v692, %v693
    %v695 = vrot.slane %v694, 1
    %v696 = vmax.f32 %v694, %v695
    %v697 = vmul.f32 %v627, %v660
    %v698 = vmul.f32 %v628, %v661
    %v699 = vmul.f32 %v629, %v662
    %v700 = vmul.f32 %v630, %v663
    %v701 = vmul.f32 %v631, %v664
    %v702 = vmul.f32 %v632, %v665
    %v703 = vmul.f32 %v633, %v666
    %v704 = vmul.f32 %v634, %v667
    %v705 = vmul.f32 %v697, %v696
    %v706 = vmul.f32 %v698, %v696
    %v707 = vmul.f32 %v699, %v696
    %v708 = vmul.f32 %v700, %v696
    %v709 = vmul.f32 %v701, %v696
    %v710 = vmul.f32 %v702, %v696
    %v711 = vmul.f32 %v703, %v696
    %v712 = vmul.f32 %v704, %v696
    %713 = vst.msk [vmem:[#allocation2] sm:$0xff] %vm635, %v705
    %714 = vst.msk [vmem:[#allocation2 + $0x8] sm:$0xff] %vm635, %v706
    %715 = vst.msk [vmem:[#allocation2 + $0x10] sm:$0xff] %vm635, %v707
    %716 = vst.msk [vmem:[#allocation2 + $0x18] sm:$0xff] %vm635, %v708
    %717 = vst.msk [vmem:[#allocation2 + $0x20] sm:$0xff] %vm635, %v709
    %718 = vst.msk [vmem:[#allocation2 + $0x28] sm:$0xff] %vm635, %v710
    %719 = vst.msk [vmem:[#allocation2 + $0x30] sm:$0xff] %vm635, %v711
    %720 = vst.msk [vmem:[#allocation2 + $0x38] sm:$0xff] %vm635, %v712
    %v722 = vsel %vm635, %v705, 0
    %v725 = vsel %vm635, %v706, 0
    %v728 = vsel %vm635, %v707, 0
    %v731 = vsel %vm635, %v708, 0
    %v734 = vsel %vm635, %v709, 0
    %v737 = vsel %vm635, %v710, 0
    %v740 = vsel %vm635, %v711, 0
    %v743 = vsel %vm635, %v712, 0
    %745 = vmatprep.subr.mxu0 0.0
    %746 = vmatpush1.msra.mxu0 %v369
    %747 = vmatprep.subr.mxu0 0.0
    %748 = vmatpush1.msra.mxu0 %v374
    %749 = vmatprep.subr.mxu0 0.0
    %750 = vmatpush1.msra.mxu0 %v379
    %751 = vmatprep.subr.mxu0 0.0
    %752 = vmatpush1.msra.mxu0 %v384
    %753 = vmatprep.subr.mxu0 0.0
    %754 = vmatpush1.msra.mxu0 %v389
    %755 = vmatprep.subr.mxu0 0.0
    %756 = vmatpush1.msra.mxu0 %v394
    %757 = vmatprep.subr.mxu0 0.0
    %758 = vmatpush1.msra.mxu0 %v399
    %759 = vmatprep.subr.mxu0 0.0
    %760 = vmatpush1.msra.mxu0 %v404
    %761 = vmatprep.subr.mxu0 0.0
    %762 = vmatpush1.msra.mxu0 0.0
    %763 = vmatprep.subr.mxu0 0.0
    %764 = vmatpush1.msra.mxu0 0.0
    %765 = vmatprep.subr.mxu0 0.0
    %766 = vmatpush1.msra.mxu0 0.0
    %767 = vmatprep.subr.mxu0 0.0
    %768 = vmatpush1.msra.mxu0 0.0
    %769 = vmatprep.subr.mxu0 0.0
    %770 = vmatpush1.msra.mxu0 0.0
    %771 = vmatprep.subr.mxu0 0.0
    %772 = vmatpush1.msra.mxu0 0.0
    %773 = vmatprep.subr.mxu0 0.0
    %774 = vmatpush1.msra.mxu0 0.0
    %775 = vmatprep.subr.mxu0 0.0
    %776 = vmatpush1.msra.mxu0 0.0
    %777 = vmatprep.subr.mxu0 0.0
    %778 = vmatpush1.msra.mxu0 0.0
    %779 = vmatprep.subr.mxu0 0.0
    %780 = vmatpush1.msra.mxu0 0.0
    %781 = vmatprep.subr.mxu0 0.0
    %782 = vmatpush1.msra.mxu0 0.0
    %783 = vmatprep.subr.mxu0 0.0
    %784 = vmatpush1.msra.mxu0 0.0
    %785 = vmatprep.subr.mxu0 0.0
    %786 = vmatpush1.msra.mxu0 0.0
    %787 = vmatprep.subr.mxu0 0.0
    %788 = vmatpush1.msra.mxu0 0.0
    %789 = vmatprep.subr.mxu0 0.0
    %790 = vmatpush1.msra.mxu0 0.0
    %791 = vmatprep.subr.mxu0 0.0
    %792 = vmatpush1.msra.mxu0 0.0
    %793 = vmatprep.subr.mxu0 0.0
    %794 = vmatpush1.msra.mxu0 0.0
    %795 = vmatprep.subr.mxu0 0.0
    %796 = vmatpush1.msra.mxu0 0.0
    %797 = vmatprep.subr.mxu0 0.0
    %798 = vmatpush1.msra.mxu0 0.0
    %799 = vmatprep.subr.mxu0 0.0
    %800 = vmatpush1.msra.mxu0 0.0
    %801 = vmatprep.subr.mxu0 0.0
    %802 = vmatpush1.msra.mxu0 0.0
    %803 = vmatprep.subr.mxu0 0.0
    %804 = vmatpush1.msra.mxu0 0.0
    %805 = vmatprep.subr.mxu0 0.0
    %806 = vmatpush1.msra.mxu0 0.0
    %807 = vmatprep.subr.mxu0 0.0
    %808 = vmatpush1.msra.mxu0 0.0
    %809 = vmatprep.mubr.f32.mxu0 0.0
    %810 = vmatmul.mubr.f32.gmra.mrb[0].mxu0 %v722
    %v811 = vpop.f32.mrb[0].mxu0
    %v812 = vadd.f32 0.0, %v811
    %v813 = vpop.f32.mrb[0].mxu0
    %814 = vmatprep.mubr.f32.mxu0 0.0
    %815 = vmatmul.mubr.f32.gmra.mrb[0].mxu0 %v725
    %v816 = vpop.f32.mrb[0].mxu0
    %v817 = vadd.f32 0.0, %v816
    %v818 = vpop.f32.mrb[0].mxu0
    %819 = vmatprep.mubr.f32.mxu0 0.0
    %820 = vmatmul.mubr.f32.gmra.mrb[0].mxu0 %v728
    %v821 = vpop.f32.mrb[0].mxu0
    %v822 = vadd.f32 0.0, %v821
    %v823 = vpop.f32.mrb[0].mxu0
    %824 = vmatprep.mubr.f32.mxu0 0.0
    %825 = vmatmul.mubr.f32.gmra.mrb[0].mxu0 %v731
    %v826 = vpop.f32.mrb[0].mxu0
    %v827 = vadd.f32 0.0, %v826
    %v828 = vpop.f32.mrb[0].mxu0
    %829 = vmatprep.mubr.f32.mxu0 0.0
    %830 = vmatmul.mubr.f32.gmra.mrb[0].mxu0 %v734
    %v831 = vpop.f32.mrb[0].mxu0
    %v832 = vadd.f32 0.0, %v831
    %v833 = vpop.f32.mrb[0].mxu0
    %834 = vmatprep.mubr.f32.mxu0 0.0
    %835 = vmatmul.mubr.f32.gmra.mrb[0].mxu0 %v737
    %v836 = vpop.f32.mrb[0].mxu0
    %v837 = vadd.f32 0.0, %v836
    %v838 = vpop.f32.mrb[0].mxu0
    %839 = vmatprep.mubr.f32.mxu0 0.0
    %840 = vmatmul.mubr.f32.gmra.mrb[0].mxu0 %v740
    %v841 = vpop.f32.mrb[0].mxu0
    %v842 = vadd.f32 0.0, %v841
    %v843 = vpop.f32.mrb[0].mxu0
    %844 = vmatprep.mubr.f32.mxu0 0.0
    %845 = vmatmul.mubr.f32.gmra.mrb[0].mxu0 %v743
    %v846 = vpop.f32.mrb[0].mxu0
    %v847 = vadd.f32 0.0, %v846
    %v848 = vpop.f32.mrb[0].mxu0
    %849 = vdwg.mxu0
    %vm850 = vcmp.ge.f32.partialorder %v812, 0.0
    %vm851 = vcmp.ge.f32.partialorder %v817, 0.0
    %vm852 = vcmp.ge.f32.partialorder %v822, 0.0
    %vm853 = vcmp.ge.f32.partialorder %v827, 0.0
    %vm854 = vcmp.ge.f32.partialorder %v832, 0.0
    %vm855 = vcmp.ge.f32.partialorder %v837, 0.0
    %vm856 = vcmp.ge.f32.partialorder %v842, 0.0
    %vm857 = vcmp.ge.f32.partialorder %v847, 0.0
    %v858 = vmul.f32 %v812, 0.01
    %v859 = vmul.f32 %v817, 0.01
    %v860 = vmul.f32 %v822, 0.01
    %v861 = vmul.f32 %v827, 0.01
    %v862 = vmul.f32 %v832, 0.01
    %v863 = vmul.f32 %v837, 0.01
    %v864 = vmul.f32 %v842, 0.01
    %v865 = vmul.f32 %v847, 0.01
    %v866 = vsel %vm850, %v812, %v858
    %v867 = vsel %vm851, %v817, %v859
    %v868 = vsel %vm852, %v822, %v860
    %v869 = vsel %vm853, %v827, %v861
    %v870 = vsel %vm854, %v832, %v862
    %v871 = vsel %vm855, %v837, %v863
    %v872 = vsel %vm856, %v842, %v864
    %v873 = vsel %vm857, %v847, %v865
    %874 = vst [vmem:[%s6] sm:$0xff] %v866
    %875 = vst [vmem:[%s6 + $0x8] sm:$0xff] %v867
    %876 = vst [vmem:[%s6 + $0x10] sm:$0xff] %v868
    %877 = vst [vmem:[%s6 + $0x18] sm:$0xff] %v869
    %878 = vst [vmem:[%s6 + $0x20] sm:$0xff] %v870
    %879 = vst [vmem:[%s6 + $0x28] sm:$0xff] %v871
    %880 = vst [vmem:[%s6 + $0x30] sm:$0xff] %v872
    %881 = vst [vmem:[%s6 + $0x38] sm:$0xff] %v873
    // Predicated region
    $region26: #{gcn_layer.1} parent=1 // pred_check
      _
    $region27: #{gcn_layer.1} parent=1 // pred_check_branch
      %883 = sbr.rel (0) target = $region29
    $region28: #{gcn_layer.1} parent=1 // pred_region
      _
    $region29: #{gcn_layer.1} parent=1 // pred_fallthru
      _
    // Predicated region
    $region30: #{gcn_layer.1} parent=1 // pred_check
      _
    $region31: #{gcn_layer.1} parent=1 // pred_check_branch
      %885 = sbr.rel (0) target = $region33
    $region32: #{gcn_layer.1} parent=1 // pred_region
      %s887 = ssub.s32 1024, 1024
      %888 = vsyncadd [#allocation3], %s887
      %s889 = sshll.u32 [#allocation2], 4
      %s890 = int_to_ptr.vmem [resolvable:$true] %s889
      %895 = dma.vmem_to_hbm [thread:$0]  %s890, 1024, %s7, [#allocation3], 128, 128, 8
    $region33: #{gcn_layer.1} parent=1 // pred_fallthru
      _
    // Predicated region
    $region34: #{gcn_layer.1} parent=1 // pred_check
      _
    $region35: #{gcn_layer.1} parent=1 // pred_check_branch
      %897 = sbr.rel (0) target = $region37
    $region36: #{gcn_layer.1} parent=1 // pred_region
      _
    $region37: #{gcn_layer.1} parent=1 // pred_fallthru
      _
    // Predicated region
    $region38: #{gcn_layer.1} parent=1 // pred_check
      _
    $region39: #{gcn_layer.1} parent=1 // pred_check_branch
      %899 = sbr.rel (0) target = $region41
    $region40: #{gcn_layer.1} parent=1 // pred_region
      %900 = dma.done [#allocation3], 1024
    $region41: #{gcn_layer.1} parent=1 // pred_fallthru
      _
    %901 = vsyncpa [#allocation3], 1

</llo_original>
